<compile_context>
chip_gen: v6e
topology: v6e:2x2x1
jax: 0.10.0
libtpu: 0.0.40
codegen_flags: <defaults>
</compile_context>

<pallas_src>
import jax
import jax.numpy as jnp
import numpy as np
from jax.experimental import pallas as pl
from jax.experimental.pallas import tpu as pltpu


def _round_up(x, m):
    return ((x + m - 1) // m) * m


def _pick_divisor_tile(total, cap, quantum):
    """Largest multiple of `quantum` that is <= cap and divides `total`."""
    t = min(cap, total)
    t = max((t // quantum) * quantum, quantum)
    while t > quantum and total % t != 0:
        t -= quantum
    return t


def _vmem_cap_bytes():
    # Generation-aware budget: ~75% of physical VMEM (=> ~96 MiB on v5e/v6e,
    # ~48 MiB on v7x).  Falls back to a v7x-safe value if the query fails.
    try:
        phys = int(pltpu.get_tpu_info().vmem_capacity_bytes)
    except Exception:
        phys = 64 << 20
    return max(16 << 20, (phys * 3) // 4)


# ----------------------------- Pallas kernel -------------------------------
def _linear_kernel(x_ref, w_ref, b_ref, o_ref, acc_ref):
    # x_ref: (tm, tk) bf16   w_ref: (tk, tn) bf16
    # b_ref: (1,  tn) f32    o_ref: (tm, tn) f32   acc_ref: (tm, tn) f32
    k = pl.program_id(2)

    @pl.when(k == 0)
    def _():
        acc_ref[...] = jnp.zeros_like(acc_ref)

    acc_ref[...] += jnp.dot(x_ref[...], w_ref[...],
                            preferred_element_type=jnp.float32)

    @pl.when(k == pl.num_programs(2) - 1)
    def _():
        o_ref[...] = (acc_ref[...] + b_ref[...]).astype(o_ref.dtype)


def linear_pallas(x2, w_packed, b_packed, *, n_valid_cols,
                  tm_max=512, tn_max=512, tk_max=1024, out_dtype=jnp.float32):
    """y = x2 @ w_packed + b_packed with a tiled Pallas TPU matmul.

    x2:       (M, Kp)   float32 / bfloat16 (already K-matched to w_packed)
    w_packed: (Kp, Cp)  bfloat16  (nn.Linear weight, transposed & padded once)
    b_packed: (1, Cp)   float32
    returns   (M, n_valid_cols) out_dtype
    """
    M, K = x2.shape
    Kp, Cp = w_packed.shape
    assert K == Kp, "activations must match the packed weight's K layout"

    # ----- tile selection ---------------------------------------------------
    Mp = _round_up(max(M, 8), 8)
    tm = _pick_divisor_tile(Mp, tm_max, 8)
    if tm < 64 and Mp > 256:
        # Avoid pathologically short MXU tiles on awkward M: pad M instead.
        tm = min(tm_max, 256)
        Mp = _round_up(Mp, tm)

    tn = _pick_divisor_tile(Cp, tn_max, 128)          # Cp is a 128 multiple
    if Kp % 128 == 0:
        tk = _pick_divisor_tile(Kp, tk_max, 128)
    else:
        tk = Kp                                        # single full-extent K block

    grid = (Mp // tm, Cp // tn, Kp // tk)

    # ----- per-call activation prep (skip the HBM copy when possible) -------
    x_bf = x2.astype(jnp.bfloat16)
    if Mp != M:
        x_bf = jnp.zeros((Mp, K), jnp.bfloat16).at[:M, :].set(x_bf)

    # ----- exact VMEM accounting ---------------------------------------------
    out_bytes = np.dtype(out_dtype).itemsize
    vmem_need = (2 * tm * tk * 2            # x tiles, double-buffered bf16
                 + 2 * tk * tn * 2          # weight tiles, double-buffered bf16
                 + 2 * 8 * tn * 4           # bias tiles (sublane-padded), f32
                 + 2 * tm * tn * out_bytes  # output tiles, double-buffered
                 + tm * tn * 4)             # f32 accumulator scratch
    vmem_limit = int(min(_vmem_cap_bytes(),
                         max(vmem_need + (2 << 20), 8 << 20)))

    y = pl.pallas_call(
        _linear_kernel,
        out_shape=jax.ShapeDtypeStruct((Mp, Cp), out_dtype),
        grid_spec=pltpu.PrefetchScalarGridSpec(
            num_scalar_prefetch=0,
            grid=grid,
            in_specs=[
                pl.BlockSpec((tm, tk), lambda i, j, k: (i, k)),
                pl.BlockSpec((tk, tn), lambda i, j, k: (k, j)),
                pl.BlockSpec((1, tn), lambda i, j, k: (0, j)),
            ],
            out_specs=pl.BlockSpec((tm, tn), lambda i, j, k: (i, j)),
            scratch_shapes=[pltpu.VMEM((tm, tn), jnp.float32)],
        ),
        compiler_params=pltpu.CompilerParams(
            dimension_semantics=("parallel", "parallel", "arbitrary"),
            vmem_limit_bytes=vmem_limit,
        ),
    )(x_bf, w_packed, b_packed)

    if Mp == M and Cp == n_valid_cols:
        return y
    return y[:M, :n_valid_cols]


# --------------------------- Module-level wrapper ---------------------------
class LinearDecoder:
    """JAX/Pallas equivalent of Linear_Decoder(nn.Module)."""

    def __init__(self, latent_dim, output_dim, num_nodes, key=None):
        self.in_features = latent_dim * num_nodes
        self.out_features = output_dim * num_nodes
        if key is None:
            key = jax.random.PRNGKey(0)
        kw, kb = jax.random.split(key)
        # nn.Linear default init: U(-1/sqrt(fan_in), 1/sqrt(fan_in))
        bound = 1.0 / np.sqrt(self.in_features)
        self.weight = jax.random.uniform(
            kw, (self.out_features, self.in_features), jnp.float32,
            minval=-bound, maxval=bound)
        self.bias = jax.random.uniform(
            kb, (self.out_features,), jnp.float32, minval=-bound, maxval=bound)

        # ---- one-time parameter packing (hoisted out of forward) ----
        #  * K kept unpadded when it can be a single full-extent block,
        #    otherwise padded to a 128 multiple so it can be lane-dense tiled;
        #  * output dim padded to a 128 multiple for unmasked `vst` stores;
        #  * weight transposed to (K, C) and cast to bf16 exactly once.
        K, C = self.in_features, self.out_features
        self._Kp = K if (K % 128 == 0 or K <= 1024) else _round_up(K, 128)
        self._Cp = _round_up(C, 128)
        w_t = self.weight.T.astype(jnp.bfloat16)                  # (K, C)
        self._w_packed = jnp.zeros((self._Kp, self._Cp), jnp.bfloat16)
        self._w_packed = self._w_packed.at[:K, :C].set(w_t)
        self._b_packed = jnp.zeros((1, self._Cp), jnp.float32).at[0, :C].set(
            self.bias.astype(jnp.float32))
        self._w_packed = jax.block_until_ready(self._w_packed)
        self._b_packed = jax.block_until_ready(self._b_packed)

    def __call__(self, z):
        lead = z.shape[:-1]
        assert z.shape[-1] == self.in_features
        x2 = z.reshape(-1, self.in_features)                      # (M, K)
        if self._Kp != self.in_features:
            # Large non-128-aligned K: pad activations to the packed K layout.
            x2 = jnp.zeros((x2.shape[0], self._Kp), x2.dtype).at[
                :, :self.in_features].set(x2)
        y2 = linear_pallas(x2, self._w_packed, self._b_packed,
                           n_valid_cols=self.out_features)        # (M, C_out)
        return y2.reshape(*lead, self.out_features)


# -------------------------------- reference ---------------------------------
def reference_forward(dec: LinearDecoder, z):
    """Host-side reference matching the kernel's bf16-input / f32-accumulate math."""
    x2 = np.asarray(z, np.float32).reshape(-1, dec.in_features)
    x_bf = np.asarray(jnp.asarray(x2).astype(jnp.bfloat16).astype(jnp.float32))
    w_bf = np.asarray(jnp.asarray(dec.weight).astype(jnp.bfloat16).astype(jnp.float32))
    b = np.asarray(dec.bias, np.float32)
    y2 = x_bf.astype(np.float64) @ w_bf.T.astype(np.float64) + b.astype(np.float64)
    return y2.astype(np.float32).reshape(*z.shape[:-1], dec.out_features)


if __name__ == "__main__":
    latent_dim = 4
    output_dim = 3
    num_nodes = 16
    seq_len = 8
    batch = 2

    key = jax.random.PRNGKey(0)
    kz, kp = jax.random.split(key)
    # z: (seq, batch, latent_dim * num_nodes) — Linear acts on the last dim.
    z = jax.random.normal(kz, (seq_len, batch, num_nodes * latent_dim), jnp.float32)

    dec = LinearDecoder(latent_dim, output_dim, num_nodes, key=kp)

    out = dec(z)
    out = jax.block_until_ready(out)

    ref = reference_forward(dec, z)
    assert out.shape == (seq_len, batch, num_nodes * output_dim)
    np.testing.assert_allclose(np.asarray(out), ref, rtol=1e-4, atol=1e-4)

    print("KERNEL_OK")
</pallas_src>

<mosaic_0001>
module attributes {stable_mosaic.version = 11 : i64} {
  func.func @_linear_kernel(%arg0: i32, %arg1: i32, %arg2: i32, %arg3: memref<16x64xbf16, #tpu.memory_space<vmem>>, %arg4: memref<64x128xbf16, #tpu.memory_space<vmem>>, %arg5: memref<1x128xf32, #tpu.memory_space<vmem>>, %arg6: memref<16x128xf32, #tpu.memory_space<vmem>>, %arg7: memref<16x128xf32, #tpu.memory_space<vmem>>) attributes {dimension_semantics = [#tpu.dimension_semantics<parallel>, #tpu.dimension_semantics<parallel>, #tpu.dimension_semantics<arbitrary>], iteration_bounds = array<i64: 1, 1, 1>, scalar_prefetch = 0 : i64, scratch_operands = 1 : i64, tpu.core_type = #tpu.core_type<tc>, window_params = [{transform_indices = @transform_0, window_bounds = array<i64: 16, 64>}, {transform_indices = @transform_1, window_bounds = array<i64: 64, 128>}, {transform_indices = @transform_2, window_bounds = array<i64: 1, 128>}, {transform_indices = @transform_3, window_bounds = array<i64: 16, 128>}]} {
    %c0_i32 = arith.constant 0 : i32
    %0 = arith.cmpi eq, %arg2, %c0_i32 : i32
    %1 = arith.extui %0 : i1 to i32
    %c0_i32_0 = arith.constant 0 : i32
    %2 = arith.cmpi ne, %1, %c0_i32_0 : i32
    scf.if %2 {
      %cst_10 = arith.constant 0.000000e+00 : f32
      %12 = vector.broadcast %cst_10 : f32 to vector<16x128xf32>
      %c0_11 = arith.constant 0 : index
      %c0_12 = arith.constant 0 : index
      %13 = vector.load %arg7[%c0_11, %c0_12] : memref<16x128xf32, #tpu.memory_space<vmem>>, vector<16x128xf32>
      tpu.vector_store %arg7[%c0_11, %c0_12], %12 {strides = array<i32>} : memref<16x128xf32, #tpu.memory_space<vmem>>, vector<16x128xf32>,
    } else {
    }
    %c0 = arith.constant 0 : index
    %c0_1 = arith.constant 0 : index
    %3 = vector.load %arg7[%c0, %c0_1] : memref<16x128xf32, #tpu.memory_space<vmem>>, vector<16x128xf32>
    %c0_2 = arith.constant 0 : index
    %c0_3 = arith.constant 0 : index
    %4 = vector.load %arg3[%c0_2, %c0_3] : memref<16x64xbf16, #tpu.memory_space<vmem>>, vector<16x64xbf16>
    %c0_4 = arith.constant 0 : index
    %c0_5 = arith.constant 0 : index
    %5 = vector.load %arg4[%c0_4, %c0_5] : memref<64x128xbf16, #tpu.memory_space<vmem>>, vector<64x128xbf16>
    %cst = arith.constant dense<0.000000e+00> : vector<16x128xf32>
    %6 = tpu.matmul %4, %5, %cst {dimension_numbers = #tpu.dot_dimension_numbers<[1], [0], [0], [1], [0, 0, 1, 1], [], []>} : vector<16x64xbf16>, vector<64x128xbf16>, vector<16x128xf32> -> vector<16x128xf32>
    %7 = arith.addf %3, %6 : vector<16x128xf32>
    %c0_6 = arith.constant 0 : index
    %c0_7 = arith.constant 0 : index
    %8 = vector.load %arg7[%c0_6, %c0_7] : memref<16x128xf32, #tpu.memory_space<vmem>>, vector<16x128xf32>
    tpu.vector_store %arg7[%c0_6, %c0_7], %7 {strides = array<i32>} : memref<16x128xf32, #tpu.memory_space<vmem>>, vector<16x128xf32>,
    %c0_i32_8 = arith.constant 0 : i32
    %9 = arith.cmpi eq, %arg2, %c0_i32_8 : i32
    %10 = arith.extui %9 : i1 to i32
    %c0_i32_9 = arith.constant 0 : i32
    %11 = arith.cmpi ne, %10, %c0_i32_9 : i32
    scf.if %11 {
      %c0_10 = arith.constant 0 : index
      %c0_11 = arith.constant 0 : index
      %12 = vector.load %arg7[%c0_10, %c0_11] : memref<16x128xf32, #tpu.memory_space<vmem>>, vector<16x128xf32>
      %c0_12 = arith.constant 0 : index
      %c0_13 = arith.constant 0 : index
      %13 = vector.load %arg5[%c0_12, %c0_13] : memref<1x128xf32, #tpu.memory_space<vmem>>, vector<1x128xf32>
      %14 = vector.broadcast %13 : vector<1x128xf32> to vector<16x128xf32>
      %15 = arith.addf %12, %14 : vector<16x128xf32>
      %c0_14 = arith.constant 0 : index
      %c0_15 = arith.constant 0 : index
      %16 = vector.load %arg6[%c0_14, %c0_15] : memref<16x128xf32, #tpu.memory_space<vmem>>, vector<16x128xf32>
      tpu.vector_store %arg6[%c0_14, %c0_15], %15 {strides = array<i32>} : memref<16x128xf32, #tpu.memory_space<vmem>>, vector<16x128xf32>,
    } else {
    }
    return
  }
  func.func @transform_0(%arg0: i32, %arg1: i32, %arg2: i32) -> (i32, i32) {
    %c0_i32 = arith.constant 0 : i32
    return %arg0, %arg2 : i32, i32
  }
  func.func @transform_1(%arg0: i32, %arg1: i32, %arg2: i32) -> (i32, i32) {
    %c0_i32 = arith.constant 0 : i32
    return %arg2, %arg1 : i32, i32
  }
  func.func @transform_2(%arg0: i32, %arg1: i32, %arg2: i32) -> (i32, i32) {
    %c0_i32 = arith.constant 0 : i32
    %c0_i32_0 = arith.constant 0 : i32
    return %c0_i32, %arg1 : i32, i32
  }
  func.func @transform_3(%arg0: i32, %arg1: i32, %arg2: i32) -> (i32, i32) {
    %c0_i32 = arith.constant 0 : i32
    return %arg0, %arg1 : i32, i32
  }
}

</mosaic_0001>

<llo_original>
// kernel: tpu_custom_call.1
$region0: #{tpu_custom_call.1}
  #allocation0 [shape = 'u32[]', space=smem, size = 0x4, offset = 0x4, fixed_abs, tag = 'smem constant byte address 0x4 - core index']
  #allocation1 [shape = 'u32[144,128]{1,0:T(1,128)}', space=vmem, size = 0x12000, scoped, tag = 'internal scratch']
  #allocation2 [shape = 'f32[16,128]{1,0:T(8,128)}', space=vmem, size = 0x2000, scoped, tag = 'scratch operand']
  %s0 = inlined_call_operand.hbm [shape: bf16[16,64], index: 0, kind: input, shape index: {}]
  %s1 = inlined_call_operand.hbm [shape: bf16[64,128], index: 1, kind: input, shape index: {}]
  %s2 = inlined_call_operand.vmem [shape: f32[1,128], index: 2, kind: input, shape index: {}]
  %s3 = inlined_call_operand.hbm [shape: f32[16,128], index: 3, kind: output, shape index: {}]
  %s4 = sld [smem:[#allocation0]]
  $region38: #{tpu_custom_call.1} parent=0
    _
  %s6 = ssub.s32 1, %s4
  %s7 = scalar_select 0, %s6, %s4
  $region1: #{tpu_custom_call.1} parent=0
    #allocation3 [shape = 'u8[4096]{0}', space=vmem, size = 0x1000, scoped, tag = 'input window, operand 0, single buffered']
    #allocation4 [shape = 's32[1]{0}', space=sflag, size = 0x4, scoped, tag = 'scoped memory for tpu_custom_call.1']
    #allocation5 [shape = 's32[1]{0}', space=sflag, size = 0x4, scoped, tag = 'scoped memory for tpu_custom_call.1']
    #allocation6 [shape = 'u8[16384]{0}', space=vmem, size = 0x4000, scoped, tag = 'input window, operand 1, single buffered']
    #allocation7 [shape = 's32[1]{0}', space=sflag, size = 0x4, scoped, tag = 'scoped memory for tpu_custom_call.1']
    #allocation8 [shape = 'u8[8192]{0}', space=vmem, size = 0x2000, scoped, tag = 'output window, operand 0, single buffered']
    %8 = vsyncpa [#allocation4], 0
    %9 = vsyncpa [#allocation7], 0
    %10 = vsyncpa [#allocation5], 0
    // Predicated region
    $region2: #{tpu_custom_call.1} parent=1 // pred_check
      _
    $region3: #{tpu_custom_call.1} parent=1 // pred_check_branch
      %12 = sbr.rel (0) target = $region5
    $region4: #{tpu_custom_call.1} parent=1 // pred_region
      %s14 = ssub.s32 128, 128
      %15 = vsyncadd [#allocation4], %s14
      %s16 = sshll.u32 [#allocation3], 4
      %s17 = int_to_ptr.vmem [resolvable:$true] %s16
      %22 = dma.hbm_to_vmem [thread:$0]  %s0, 128, %s17, [#allocation4], 64, 64, 4
    $region5: #{tpu_custom_call.1} parent=1 // pred_fallthru
      _
    // Predicated region
    $region6: #{tpu_custom_call.1} parent=1 // pred_check
      _
    $region7: #{tpu_custom_call.1} parent=1 // pred_check_branch
      %24 = sbr.rel (0) target = $region9
    $region8: #{tpu_custom_call.1} parent=1 // pred_region
      %s26 = ssub.s32 512, 512
      %27 = vsyncadd [#allocation7], %s26
      %s28 = sshll.u32 [#allocation6], 4
      %s29 = int_to_ptr.vmem [resolvable:$true] %s28
      %34 = dma.hbm_to_vmem [thread:$0]  %s1, 512, %s29, [#allocation7], 64, 64, 4
    $region9: #{tpu_custom_call.1} parent=1 // pred_fallthru
      _
    // Predicated region
    $region10: #{tpu_custom_call.1} parent=1 // pred_check
      _
    $region11: #{tpu_custom_call.1} parent=1 // pred_check_branch
      %36 = sbr.rel (0) target = $region13
    $region12: #{tpu_custom_call.1} parent=1 // pred_region
      _
    $region13: #{tpu_custom_call.1} parent=1 // pred_fallthru
      _
    // Predicated region
    $region14: #{tpu_custom_call.1} parent=1 // pred_check
      _
    $region15: #{tpu_custom_call.1} parent=1 // pred_check_branch
      %38 = sbr.rel (0) target = $region17
    $region16: #{tpu_custom_call.1} parent=1 // pred_region
      %39 = dma.done [#allocation4], 128
    $region17: #{tpu_custom_call.1} parent=1 // pred_fallthru
      _
    // Predicated region
    $region18: #{tpu_custom_call.1} parent=1 // pred_check
      _
    $region19: #{tpu_custom_call.1} parent=1 // pred_check_branch
      %41 = sbr.rel (0) target = $region21
    $region20: #{tpu_custom_call.1} parent=1 // pred_region
      %42 = dma.done [#allocation7], 512
    $region21: #{tpu_custom_call.1} parent=1 // pred_fallthru
      _
    %p44 = scmp.eq.s32.totalorder 0, 0
    // Predicated region
    $region22: #{tpu_custom_call.1} parent=1 // pred_check
      %p45 = pneg %p44
    $region23: #{tpu_custom_call.1} parent=1 // pred_check_branch
      %47 = sbr.rel (%p45) target = $region25
    $region24: #{tpu_custom_call.1} parent=1 // pred_region
      %48 = vst [vmem:[#allocation2] sm:$0xff] 0.0
      %49 = vst [vmem:[#allocation2 + $0x8] sm:$0xff] 0.0
    $region25: #{tpu_custom_call.1} parent=1 // pred_fallthru
      _
    %v50 = vld [vmem:[#allocation2] sm:$0xff]
    %v51 = vld [vmem:[#allocation2 + $0x8] sm:$0xff]
    %v52 = vld [vmem:[#allocation3] sm:$0xf]
    %v53 = vld [vmem:[#allocation3 + $0x4] sm:$0xf]
    %v54 = vld [vmem:[#allocation6] sm:$0xf]
    %v55 = vld [vmem:[#allocation6 + $0x4] sm:$0xf]
    %v56 = vld [vmem:[#allocation6 + $0x8] sm:$0xf]
    %v57 = vld [vmem:[#allocation6 + $0xc] sm:$0xf]
    %v58 = vld [vmem:[#allocation6 + $0x10] sm:$0xf]
    %v59 = vld [vmem:[#allocation6 + $0x14] sm:$0xf]
    %v60 = vld [vmem:[#allocation6 + $0x18] sm:$0xf]
    %v61 = vld [vmem:[#allocation6 + $0x1c] sm:$0xf]
    %v64 = vunpack.c.l.b16 %v52
    %v65 = vunpack.c.l.b16 %v53
    %v66 = vpack.c.b16 %v65, %v64
    %v75 = vunpack.c.l.b16 %v54
    %v76 = vunpack.c.l.b16 %v55
    %v77 = vunpack.c.l.b16 %v56
    %v78 = vunpack.c.l.b16 %v57
    %v79 = vunpack.c.l.b16 %v58
    %v80 = vunpack.c.l.b16 %v59
    %v81 = vunpack.c.l.b16 %v60
    %v82 = vunpack.c.l.b16 %v61
    %v83 = vpack.c.b16 %v76, %v75
    %v84 = vpack.c.b16 %v78, %v77
    %v85 = vpack.c.b16 %v80, %v79
    %v86 = vpack.c.b16 %v82, %v81
    %vm91 = vcmask 523264
    %v93 = vsel %vm91, %v66, 0
    %95 = vmatprep.subr.bf16.mxu0 0
    %96 = vmatpush1.bf16.msra.mxu0 0
    %97 = vmatprep.subr.bf16.mxu0 0
    %98 = vmatpush1.bf16.msra.mxu0 0
    %99 = vmatprep.subr.bf16.mxu0 0
    %100 = vmatpush1.bf16.msra.mxu0 0
    %101 = vmatprep.subr.bf16.mxu0 0
    %102 = vmatpush1.bf16.msra.mxu0 0
    %103 = vmatprep.subr.bf16.mxu0 0
    %104 = vmatpush1.bf16.msra.mxu0 %v86
    %105 = vmatprep.subr.bf16.mxu0 0
    %106 = vmatpush1.bf16.msra.mxu0 %v85
    %107 = vmatprep.subr.bf16.mxu0 0
    %108 = vmatpush1.bf16.msra.mxu0 %v84
    %109 = vmatprep.subr.bf16.mxu0 0
    %110 = vmatpush1.bf16.msra.mxu0 %v83
    %111 = vmatprep.subr.bf16.mxu0 0
    %112 = vmatpush2.bf16.msra.mxu0 0
    %113 = vmatprep.subr.bf16.mxu0 0
    %114 = vmatpush2.bf16.msra.mxu0 0
    %115 = vmatprep.subr.bf16.mxu0 0
    %116 = vmatpush2.bf16.msra.mxu0 0
    %117 = vmatprep.subr.bf16.mxu0 0
    %118 = vmatpush2.bf16.msra.mxu0 0
    %119 = vmatprep.subr.bf16.mxu0 0
    %120 = vmatpush2.bf16.msra.mxu0 0
    %121 = vmatprep.subr.bf16.mxu0 0
    %122 = vmatpush2.bf16.msra.mxu0 0
    %123 = vmatprep.subr.bf16.mxu0 0
    %124 = vmatpush2.bf16.msra.mxu0 0
    %125 = vmatprep.subr.bf16.mxu0 0
    %126 = vmatpush2.bf16.msra.mxu0 0
    %127 = vmatprep.mubr.bf16.mxu0 0
    %128 = vmatmul.mubr.bf16.gmra.mxu0 %v93
    %v129 = vpop.f32.mrf.mxu0
    %v130 = vadd.f32 0.0, %v129
    %v131 = vpop.f32.mrf.mxu0
    %v132 = vpop.f32.mrf.mxu0
    %v133 = vadd.f32 0.0, %v132
    %v134 = vpop.f32.mrf.mxu0
    %135 = vdwg.mxu0
    %v136 = vadd.f32 %v50, %v130
    %v137 = vadd.f32 %v51, %v133
    %138 = vst [vmem:[#allocation2] sm:$0xff] %v136
    %139 = vst [vmem:[#allocation2 + $0x8] sm:$0xff] %v137
    // Predicated region
    $region26: #{tpu_custom_call.1} parent=1 // pred_check
      %p140 = pneg %p44
    $region27: #{tpu_custom_call.1} parent=1 // pred_check_branch
      %142 = sbr.rel (%p140) target = $region29
    $region28: #{tpu_custom_call.1} parent=1 // pred_region
      %v143 = vld [vmem:[#allocation2] sm:$0xff]
      %v144 = vld [vmem:[#allocation2 + $0x8] sm:$0xff]
      %v145 = vld [vmem:[%s2] sm:$0x1]
      %v147 = vlaneseq
      %v148 = vshrl.u32 %v147, 7
      %v149 = vsub.s32 0, %v148
      %v150 = vrot.slane %v145, %v149
      %v152 = vadd.f32 %v143, %v150
      %v153 = vadd.f32 %v144, %v150
      %154 = vst [vmem:[#allocation8] sm:$0xff] %v152
      %155 = vst [vmem:[#allocation8 + $0x8] sm:$0xff] %v153
    $region29: #{tpu_custom_call.1} parent=1 // pred_fallthru
      _
    // Predicated region
    $region30: #{tpu_custom_call.1} parent=1 // pred_check
      _
    $region31: #{tpu_custom_call.1} parent=1 // pred_check_branch
      %157 = sbr.rel (0) target = $region33
    $region32: #{tpu_custom_call.1} parent=1 // pred_region
      %s159 = ssub.s32 256, 256
      %160 = vsyncadd [#allocation5], %s159
      %s161 = sshll.u32 [#allocation8], 4
      %s162 = int_to_ptr.vmem [resolvable:$true] %s161
      %167 = dma.vmem_to_hbm [thread:$0]  %s162, 256, %s3, [#allocation5], 128, 128, 8
    $region33: #{tpu_custom_call.1} parent=1 // pred_fallthru
      _
    // Predicated region
    $region34: #{tpu_custom_call.1} parent=1 // pred_check
      _
    $region35: #{tpu_custom_call.1} parent=1 // pred_check_branch
      %169 = sbr.rel (0) target = $region37
    $region36: #{tpu_custom_call.1} parent=1 // pred_region
      %170 = dma.done [#allocation5], 256
    $region37: #{tpu_custom_call.1} parent=1 // pred_fallthru
      _
    %171 = vsyncpa [#allocation4], 1
    %172 = vsyncpa [#allocation7], 1
    %173 = vsyncpa [#allocation5], 1

</llo_original>
